<compile_context>
chip_gen: v7x
topology: tpu7x:2x2x1
jax: 0.10.0
libtpu: 0.0.40
codegen_flags: <defaults>
</compile_context>

<pallas_src>
import jax
import jax.numpy as jnp
from jax.experimental import pallas as pl
from jax.experimental.pallas import tpu as pltpu


def _gated_conv1x1_kernel(s_ref, x_ref, w_ref, o_ref):
    # s_ref: (1, 1, Cin)   f32  gate logits for this batch
    # x_ref: (1, HW, Cin)  bf16 activations for this batch
    # w_ref: (Cin, TC)     bf16 weight tile, MXU-native (K, N) layout
    # o_ref: (1, HW, TC)   bf16 output tile
    gate = jax.nn.sigmoid(s_ref[0])                              # (1, Cin), EUP, f32
    xv = (x_ref[0].astype(jnp.float32) * gate).astype(x_ref.dtype)   # (HW, Cin), VPU
    acc = jax.lax.dot_general(                                   # (HW, TC), MXU, f32 acc
        xv, w_ref[...],
        dimension_numbers=(((1,), (0,)), ((), ())),
        preferred_element_type=jnp.float32)
    o_ref[0] = acc.astype(o_ref.dtype)


def prepare_weight(weight_oihw):
    """One-time (param-init) weight prep: (Cout, Cin, 1, 1) -> (Cin, Cout) bf16."""
    Cout, Cin = weight_oihw.shape[:2]
    return jnp.transpose(weight_oihw.reshape(Cout, Cin)).astype(jnp.bfloat16)


def gated_conv1x1(x_nchw, s_nc11, w_kc, *, cout_tile=128):
    """x_nchw: (N, Cin, H, W); s_nc11: (N, Cin, 1, 1); w_kc: (Cin, Cout) bf16
    (from prepare_weight).  Returns (N, Cout, H, W) bf16."""
    N, Cin, H, W = x_nchw.shape
    Cout = w_kc.shape[1]
    HW = H * W

    # Layout plumbing (see TODO above): bf16 before the transpose so it moves
    # half the bytes; keep x 3-D so the HW dim stays a full-array block dim.
    x = jnp.transpose(x_nchw.astype(jnp.bfloat16), (0, 2, 3, 1)).reshape(N, HW, Cin)
    s = s_nc11.reshape(N, 1, Cin).astype(jnp.float32)

    # Cout tile: 128 matches the v5e MXU and is legal (multiple of 128) on all
    # generations; non-divisible Cout (e.g. 576) gets a masked partial last tile.
    tc = cout_tile if Cout >= cout_tile else Cout
    n_ct = pl.cdiv(Cout, tc)

    cost = pl.CostEstimate(
        flops=2 * N * HW * Cin * Cout,
        transcendentals=N * Cin,
        bytes_accessed=(N * HW * Cin * 2) + (Cin * Cout * 2)
                       + (N * HW * Cout * 2) + (N * Cin * 4),
    )

    out = pl.pallas_call(
        _gated_conv1x1_kernel,
        out_shape=jax.ShapeDtypeStruct((N, HW, Cout), jnp.bfloat16),
        grid_spec=pltpu.PrefetchScalarGridSpec(
            num_scalar_prefetch=0,
            # Cout-tile axis first (megacore shards it on v7x -> weight HBM
            # traffic not duplicated); batch axis last (weight tile is reused
            # across consecutive batch steps, only x is re-fetched).
            grid=(n_ct, N),
            in_specs=[
                pl.BlockSpec((1, 1, Cin), lambda c, n: (n, 0, 0)),    # gate logits
                pl.BlockSpec((1, HW, Cin), lambda c, n: (n, 0, 0)),   # activations
                pl.BlockSpec((Cin, tc), lambda c, n: (0, c)),         # weight tile
            ],
            out_specs=pl.BlockSpec((1, HW, tc), lambda c, n: (n, 0, c)),
        ),
        compiler_params=pltpu.CompilerParams(
            dimension_semantics=("parallel", "parallel")),
        cost_estimate=cost,
    )(s, x, w_kc)

    # (N, HW, Cout) -> NCHW, bf16 (consumer dtype).
    return jnp.transpose(out.reshape(N, H, W, Cout), (0, 3, 1, 2))


if __name__ == "__main__":
    # Small shapes consistent with the module (orig: Cin=3456, Cout=576, 7x7).
    # H = W = 7 on purpose: exercises the HW=49 (non-multiple-of-8) block case.
    N, Cin, Cout, H, W = 2, 384, 256, 7, 7

    key = jax.random.PRNGKey(0)
    k1, k2, k3 = jax.random.split(key, 3)
    x656 = jax.random.normal(k1, (N, Cin, H, W), dtype=jnp.float32)   # activations
    x660 = jax.random.normal(k2, (N, Cin, 1, 1), dtype=jnp.float32)   # gate logits
    weight = jax.random.normal(k3, (Cout, Cin, 1, 1), dtype=jnp.float32) * 0.02

    w_kc = prepare_weight(weight)                      # one-time, outside hot path
    y = jax.block_until_ready(gated_conv1x1(x656, x660, w_kc))

    # Reference in plain JAX with the same bf16 quantization points, f32 math.
    xb = x656.astype(jnp.bfloat16).astype(jnp.float32)
    g = jax.nn.sigmoid(x660.astype(jnp.float32))
    prod = (xb * g).astype(jnp.bfloat16).astype(jnp.float32)          # (N,Cin,H,W)
    wb = weight.reshape(Cout, Cin).astype(jnp.bfloat16).astype(jnp.float32)
    y_ref = jnp.einsum("nchw,oc->nohw", prod, wb)

    assert y.shape == (N, Cout, H, W), y.shape
    err = float(jnp.max(jnp.abs(y.astype(jnp.float32) - y_ref)))
    assert jnp.allclose(y.astype(jnp.float32), y_ref, atol=3e-2, rtol=3e-2), err
    print("KERNEL_OK")
</pallas_src>

<mosaic_0001>
module attributes {stable_mosaic.version = 11 : i64} {
  func.func @_gated_conv1x1_kernel(%arg0: i32, %arg1: i32, %arg2: memref<1x1x384xf32, #tpu.memory_space<vmem>>, %arg3: memref<1x49x384xbf16, #tpu.memory_space<vmem>>, %arg4: memref<384x128xbf16, #tpu.memory_space<vmem>>, %arg5: memref<1x49x128xbf16, #tpu.memory_space<vmem>>) attributes {dimension_semantics = [#tpu.dimension_semantics<parallel>, #tpu.dimension_semantics<parallel>], iteration_bounds = array<i64: 2, 2>, scalar_prefetch = 0 : i64, scratch_operands = 0 : i64, tpu.core_type = #tpu.core_type<tc>, window_params = [{transform_indices = @transform_0, window_bounds = array<i64: 1, 1, 384>}, {transform_indices = @transform_1, window_bounds = array<i64: 1, 49, 384>}, {transform_indices = @transform_2, window_bounds = array<i64: 384, 128>}, {transform_indices = @transform_3, window_bounds = array<i64: 1, 49, 128>}]} {
    %c0 = arith.constant 0 : index
    %c0_0 = arith.constant 0 : index
    %c0_1 = arith.constant 0 : index
    %0 = vector.load %arg2[%c0, %c0_0, %c0_1] : memref<1x1x384xf32, #tpu.memory_space<vmem>>, vector<1x1x384xf32>
    %1 = vector.shape_cast %0 : vector<1x1x384xf32> to vector<1x384xf32>
    %2 = arith.negf %1 : vector<1x384xf32>
    %3 = math.exp %2 : vector<1x384xf32>
    %cst = arith.constant 1.000000e+00 : f32
    %4 = vector.broadcast %cst : f32 to vector<1x384xf32>
    %5 = arith.addf %4, %3 : vector<1x384xf32>
    %6 = arith.divf %4, %5 : vector<1x384xf32>
    %c0_2 = arith.constant 0 : index
    %c0_3 = arith.constant 0 : index
    %c0_4 = arith.constant 0 : index
    %7 = vector.load %arg3[%c0_2, %c0_3, %c0_4] : memref<1x49x384xbf16, #tpu.memory_space<vmem>>, vector<1x49x384xbf16>
    %8 = vector.shape_cast %7 : vector<1x49x384xbf16> to vector<49x384xbf16>
    %9 = arith.extf %8 : vector<49x384xbf16> to vector<49x384xf32>
    %10 = vector.broadcast %6 : vector<1x384xf32> to vector<49x384xf32>
    %11 = arith.mulf %9, %10 : vector<49x384xf32>
    %12 = arith.truncf %11 : vector<49x384xf32> to vector<49x384xbf16>
    %c0_5 = arith.constant 0 : index
    %c0_6 = arith.constant 0 : index
    %13 = vector.load %arg4[%c0_5, %c0_6] : memref<384x128xbf16, #tpu.memory_space<vmem>>, vector<384x128xbf16>
    %cst_7 = arith.constant dense<0.000000e+00> : vector<49x128xf32>
    %14 = tpu.matmul %12, %13, %cst_7 {dimension_numbers = #tpu.dot_dimension_numbers<[1], [0], [0], [1], [0, 0, 1, 1], [], []>} : vector<49x384xbf16>, vector<384x128xbf16>, vector<49x128xf32> -> vector<49x128xf32>
    %15 = arith.truncf %14 : vector<49x128xf32> to vector<49x128xbf16>
    %c0_8 = arith.constant 0 : index
    %c0_9 = arith.constant 0 : index
    %c0_10 = arith.constant 0 : index
    %16 = vector.load %arg5[%c0_8, %c0_9, %c0_10] : memref<1x49x128xbf16, #tpu.memory_space<vmem>>, vector<1x49x128xbf16>
    %17 = vector.shape_cast %16 : vector<1x49x128xbf16> to vector<49x128xbf16>
    %18 = vector.shape_cast %15 : vector<49x128xbf16> to vector<1x49x128xbf16>
    tpu.vector_store %arg5[%c0_8, %c0_9, %c0_10], %18 {strides = array<i32>} : memref<1x49x128xbf16, #tpu.memory_space<vmem>>, vector<1x49x128xbf16>,
    return
  }
  func.func @transform_0(%arg0: i32, %arg1: i32) -> (i32, i32, i32) {
    %c0_i32 = arith.constant 0 : i32
    %c0_i32_0 = arith.constant 0 : i32
    %c0_i32_1 = arith.constant 0 : i32
    return %arg1, %c0_i32, %c0_i32_0 : i32, i32, i32
  }
  func.func @transform_1(%arg0: i32, %arg1: i32) -> (i32, i32, i32) {
    %c0_i32 = arith.constant 0 : i32
    %c0_i32_0 = arith.constant 0 : i32
    %c0_i32_1 = arith.constant 0 : i32
    return %arg1, %c0_i32, %c0_i32_0 : i32, i32, i32
  }
  func.func @transform_2(%arg0: i32, %arg1: i32) -> (i32, i32) {
    %c0_i32 = arith.constant 0 : i32
    %c0_i32_0 = arith.constant 0 : i32
    return %c0_i32, %arg0 : i32, i32
  }
  func.func @transform_3(%arg0: i32, %arg1: i32) -> (i32, i32, i32) {
    %c0_i32 = arith.constant 0 : i32
    %c0_i32_0 = arith.constant 0 : i32
    return %arg1, %c0_i32, %arg0 : i32, i32, i32
  }
}

</mosaic_0001>

<llo_original>
// kernel: tpu_custom_call.1
$region0: #{tpu_custom_call.1}
  #allocation0 [shape = 'u32[]', space=smem, size = 0x4, offset = 0x4, fixed_abs, tag = 'smem constant byte address 0x4 - core index']
  #allocation1 [shape = 'u32[144,128]{1,0:T(1,128)}', space=vmem, size = 0x12000, scoped, tag = 'internal scratch']
  %s0 = inlined_call_operand.vmem [shape: f32[2,1,384], index: 0, kind: input, shape index: {}]
  %s1 = inlined_call_operand.vmem [shape: bf16[2,49,384], index: 1, kind: input, shape index: {}]
  %s2 = inlined_call_operand.hbm [shape: bf16[384,256], index: 2, kind: input, shape index: {}]
  %s3 = inlined_call_operand.vmem [shape: bf16[2,49,256], index: 3, kind: output, shape index: {}]
  %s4 = sld [smem:[#allocation0]]
  $region86: #{tpu_custom_call.1} parent=0
    _
  %s6 = ssub.s32 1, %s4
  %s7 = scalar_select 0, %s6, %s4
  $region1: #{tpu_custom_call.1} parent=0
    #allocation2 [shape = 'u8[196608]{0}', space=vmem, size = 0x30000, scoped, tag = 'input window, operand 2']
    #allocation3 [shape = 's32[2]{0}', space=sflag, size = 0x8, scoped, tag = 'scoped memory for tpu_custom_call.1']
    #allocation4 [shape = 'u8[28672]{0}', space=vmem, size = 0x7000, scoped, tag = 'output window, operand 0']
    %8 = vsyncpa [#allocation3], 0
    %s9 = scalar_lea.sflag [#allocation3], 1
    %10 = vsyncpa %s9, 0
    loop: start=0, step=1, limit=6
    $region2: #{tpu_custom_call.1} parent=1 // loop_pre_header
      _
    $region3: #{tpu_custom_call.1} parent=1 // loop_header
      %s12 = sphi 0, %s16
      %p13 = scmp.ge.s32.totalorder %s12, 6
      %s19 = sphi 0, %s31
      %s20 = sphi 0, %s27
      %s21 = sphi 0, %s19
      %s22 = sphi 0, %s20
      %s23 = sphi 0, %s21
      %s24 = sphi 0, %s22
      %s34 = sphi 0, %s36
      %s37 = sphi 0, %s34
      %s38 = sphi 0, %s37
      %s54 = sphi 0, %s38
      %s60 = sphi 0, %s62
      %s63 = sphi 0, %s60
      %s64 = sphi 0, %s63
      %s80 = sphi 0, %s64
      %s86 = sphi 0, %s88
      %s89 = sphi 0, %s86
      %s90 = sphi 0, %s89
      %s106 = sphi 0, %s90
      %s114 = sphi 0, %s116
      %s117 = sphi 0, %s114
      %s118 = sphi 0, %s117
      %s134 = sphi 0, %s118
    $region4: #{tpu_custom_call.1} parent=1 // loop_header_branch
      %15 = sbr.rel (%p13) target = $region8
    $region5: #{tpu_custom_call.1} parent=1 // loop_body
      %s17 = ssub.s32 %s12, 1
      %s18 = ssub.s32 %s12, 2
      %s25 = sadd.s32 1, %s20
      %p26 = scmp.ge.s32.totalorder %s25, 2
      %s27 = scalar_select %p26, 0, %s25
      %s28 = sadd.s32 1, %s19
      %s29 = scalar_select %p26, %s28, %s19
      %p30 = scmp.ge.s32.totalorder %s29, 2
      %s31 = scalar_select %p30, 0, %s29
      %s32 = ssub.s32 %s20, %s27
      %p33 = scmp.eq.s32.totalorder %s32, 0
      %s35 = sadd.s32 %s34, 1
      %s36 = scalar_select %p33, %s34, %s35
      %p39 = pneg %p33
      %p40 = scmp.eq.s32.totalorder %s12, 3
      %p41 = por %p39, %p40
      %p42 = scmp.ne.s32.totalorder %s34, %s37
      %p43 = scmp.eq.s32.totalorder %s12, 0
      %p44 = por %p42, %p43
      %p45 = scmp.ne.s32.totalorder %s34, %s37
      %p46 = scmp.eq.s32.totalorder %s17, 3
      %p47 = por %p45, %p46
      %p48 = scmp.ne.s32.totalorder %s37, %s38
      %p49 = scmp.eq.s32.totalorder %s17, 0
      %p50 = por %p48, %p49
      %p51 = scmp.ne.s32.totalorder %s37, %s38
      %p52 = scmp.eq.s32.totalorder %s18, 3
      %p53 = por %p51, %p52
      %p55 = scmp.ne.s32.totalorder %s38, %s54
      %p56 = scmp.eq.s32.totalorder %s18, 0
      %p57 = por %p55, %p56
      %s58 = ssub.s32 %s20, %s27
      %p59 = scmp.eq.s32.totalorder %s58, 0
      %s61 = sadd.s32 %s60, 1
      %s62 = scalar_select %p59, %s60, %s61
      %p65 = pneg %p59
      %p66 = scmp.eq.s32.totalorder %s12, 3
      %p67 = por %p65, %p66
      %p68 = scmp.ne.s32.totalorder %s60, %s63
      %p69 = scmp.eq.s32.totalorder %s12, 0
      %p70 = por %p68, %p69
      %p71 = scmp.ne.s32.totalorder %s60, %s63
      %p72 = scmp.eq.s32.totalorder %s17, 3
      %p73 = por %p71, %p72
      %p74 = scmp.ne.s32.totalorder %s63, %s64
      %p75 = scmp.eq.s32.totalorder %s17, 0
      %p76 = por %p74, %p75
      %p77 = scmp.ne.s32.totalorder %s63, %s64
      %p78 = scmp.eq.s32.totalorder %s18, 3
      %p79 = por %p77, %p78
      %p81 = scmp.ne.s32.totalorder %s64, %s80
      %p82 = scmp.eq.s32.totalorder %s18, 0
      %p83 = por %p81, %p82
      %s84 = ssub.s32 %s19, %s31
      %p85 = scmp.eq.s32.totalorder %s84, 0
      %s87 = sadd.s32 %s86, 1
      %s88 = scalar_select %p85, %s86, %s87
      %p91 = pneg %p85
      %p92 = scmp.eq.s32.totalorder %s12, 3
      %p93 = por %p91, %p92
      %p94 = scmp.ne.s32.totalorder %s86, %s89
      %p95 = scmp.eq.s32.totalorder %s12, 0
      %p96 = por %p94, %p95
      %p97 = scmp.ne.s32.totalorder %s86, %s89
      %p98 = scmp.eq.s32.totalorder %s17, 3
      %p99 = por %p97, %p98
      %p100 = scmp.ne.s32.totalorder %s89, %s90
      %p101 = scmp.eq.s32.totalorder %s17, 0
      %p102 = por %p100, %p101
      %p103 = scmp.ne.s32.totalorder %s89, %s90
      %p104 = scmp.eq.s32.totalorder %s18, 3
      %p105 = por %p103, %p104
      %p107 = scmp.ne.s32.totalorder %s90, %s106
      %p108 = scmp.eq.s32.totalorder %s18, 0
      %p109 = por %p107, %p108
      %s110 = ssub.s32 %s20, %s27
      %s111 = ssub.s32 %s19, %s31
      %s112 = sor.u32 %s110, %s111
      %p113 = scmp.eq.s32.totalorder %s112, 0
      %s115 = sadd.s32 %s114, 1
      %s116 = scalar_select %p113, %s114, %s115
      %p119 = pneg %p113
      %p120 = scmp.eq.s32.totalorder %s12, 3
      %p121 = por %p119, %p120
      %p122 = scmp.ne.s32.totalorder %s114, %s117
      %p123 = scmp.eq.s32.totalorder %s12, 0
      %p124 = por %p122, %p123
      %p125 = scmp.ne.s32.totalorder %s114, %s117
      %p126 = scmp.eq.s32.totalorder %s17, 3
      %p127 = por %p125, %p126
      %p128 = scmp.ne.s32.totalorder %s117, %s118
      %p129 = scmp.eq.s32.totalorder %s17, 0
      %p130 = por %p128, %p129
      %p131 = scmp.ne.s32.totalorder %s117, %s118
      %p132 = scmp.eq.s32.totalorder %s18, 3
      %p133 = por %p131, %p132
      %p135 = scmp.ne.s32.totalorder %s118, %s134
      %p136 = scmp.eq.s32.totalorder %s18, 0
      %p137 = por %p135, %p136
      %p138 = scmp.le.s32.totalorder 1, %s12
      %p139 = scmp.lt.s32.totalorder %s12, 5
      %p140 = pnand %p138, %p139
      %p141 = pneg %p140
      // Predicated region
      $region9: #{tpu_custom_call.1} parent=5 // pred_check
        _
      $region10: #{tpu_custom_call.1} parent=5 // pred_check_branch
        %143 = sbr.rel (%p140) target = $region12
      $region11: #{tpu_custom_call.1} parent=5 // pred_region
        %s144 = ssub.s32 %s12, 1
      $region12: #{tpu_custom_call.1} parent=5 // pred_fallthru
        _
      %p145 = scmp.lt.s32.totalorder %s12, 4
      // Predicated region
      $region13: #{tpu_custom_call.1} parent=5 // pred_check
        %p146 = pneg %p145
      $region14: #{tpu_custom_call.1} parent=5 // pred_check_branch
        %148 = sbr.rel (%p146) target = $region16
      $region15: #{tpu_custom_call.1} parent=5 // pred_region
        // Predicated region
        $region17: #{tpu_custom_call.1} parent=15 // pred_check
          %p149 = pneg %p44
        $region18: #{tpu_custom_call.1} parent=15 // pred_check_branch
          %151 = sbr.rel (%p149) target = $region20
        $region19: #{tpu_custom_call.1} parent=15 // pred_region
          %p152 = scmp.lt.s32.totalorder %s20, 1
          %s153 = scalar_select %p152, %s20, 1
          %s154 = smul.addr %s153, 3
          %s155 = scalar_lea.vmem %s0, %s154
        $region20: #{tpu_custom_call.1} parent=15 // pred_fallthru
          _
        // Predicated region
        $region21: #{tpu_custom_call.1} parent=15 // pred_check
          %p156 = pneg %p70
        $region22: #{tpu_custom_call.1} parent=15 // pred_check_branch
          %158 = sbr.rel (%p156) target = $region24
        $region23: #{tpu_custom_call.1} parent=15 // pred_region
          %p159 = scmp.lt.s32.totalorder %s20, 1
          %s160 = scalar_select %p159, %s20, 1
          %s161 = smul.addr %s160, 21
          %s162 = smul.addr %s161, 4
          %s163 = scalar_lea.vmem %s1, %s162
        $region24: #{tpu_custom_call.1} parent=15 // pred_fallthru
          _
        // Predicated region
        $region25: #{tpu_custom_call.1} parent=15 // pred_check
          %p164 = pneg %p96
        $region26: #{tpu_custom_call.1} parent=15 // pred_check_branch
          %166 = sbr.rel (%p164) target = $region28
        $region27: #{tpu_custom_call.1} parent=15 // pred_region
          %s167 = sand.u32 %s86, 1
          %s168 = scalar_lea.sflag [#allocation3], %s167
          %s169 = sand.u32 %s86, 1
          %s170 = smul.addr %s169, 192
          %s171 = scalar_lea.vmem [#allocation2], %s170
          %s173 = ssub.s32 3072, 3072
          %174 = vsyncadd %s168, %s173
          %s175 = smul.addr %s19, 64
          %s176 = scalar_lea.hbm %s2, %s175
          %s177 = sshll.u32 %s171, 4
          %s178 = int_to_ptr.vmem [resolvable:$true] %s177
          %183 = dma.hbm_to_vmem [thread:$0]  %s176, 3072, %s178, %s168, 128, 64, 4
        $region28: #{tpu_custom_call.1} parent=15 // pred_fallthru
          _
      $region16: #{tpu_custom_call.1} parent=5 // pred_fallthru
        _
      %p184 = scmp.le.s32.totalorder 1, %s12
      %p185 = scmp.lt.s32.totalorder %s12, 5
      %p186 = pnand %p184, %p185
      %p187 = pneg %p186
      // Predicated region
      $region29: #{tpu_custom_call.1} parent=5 // pred_check
        _
      $region30: #{tpu_custom_call.1} parent=5 // pred_check_branch
        %189 = sbr.rel (%p186) target = $region32
      $region31: #{tpu_custom_call.1} parent=5 // pred_region
        %s190 = ssub.s32 %s12, 1
        %s191 = sand.u32 %s89, 1
        %s192 = scalar_lea.sflag [#allocation3], %s191
        %s193 = sand.u32 %s89, 1
        %s194 = smul.addr %s193, 192
        %s195 = scalar_lea.vmem [#allocation2], %s194
        // Predicated region
        $region33: #{tpu_custom_call.1} parent=31 // pred_check
          %p196 = pneg %p102
        $region34: #{tpu_custom_call.1} parent=31 // pred_check_branch
          %198 = sbr.rel (%p196) target = $region36
        $region35: #{tpu_custom_call.1} parent=31 // pred_region
          %199 = dma.done %s192, 3072
        $region36: #{tpu_custom_call.1} parent=31 // pred_fallthru
          _
        %p200 = scmp.lt.s32.totalorder %s22, 1
        %s201 = scalar_select %p200, %s22, 1
        %s202 = smul.addr %s201, 3
        %s203 = scalar_lea.vmem %s0, %s202
        %p204 = pneg %p50
        %p205 = pneg %p47
        %p206 = scmp.lt.s32.totalorder %s22, 1
        %s207 = scalar_select %p206, %s22, 1
        %s208 = smul.addr %s207, 21
        %s209 = smul.addr %s208, 4
        %s210 = scalar_lea.vmem %s1, %s209
        %p211 = pneg %p76
        %p212 = pneg %p73
        %s213 = sand.u32 %s89, 1
        %s214 = scalar_lea.sflag [#allocation3], %s213
        %s215 = sand.u32 %s89, 1
        %s216 = smul.addr %s215, 192
        %s217 = scalar_lea.vmem [#allocation2], %s216
        %p218 = pneg %p102
        %p219 = pneg %p99
        %p220 = pneg %p130
        %p221 = pneg %p127
        %s222 = sand.u32 %s117, 1
        %s223 = sand.u32 %s117, 1
        %s224 = smul.addr %s223, 28
        %s225 = scalar_lea.vmem [#allocation4], %s224
        %p226 = scmp.lt.s32.totalorder %s22, 1
        %s227 = scalar_select %p226, %s22, 1
        %s228 = smul.addr %s227, 3
        %s229 = scalar_lea.vmem %s0, %s228
        %p230 = scmp.lt.s32.totalorder %s22, 1
        %s231 = scalar_select %p230, %s22, 1
        %s232 = smul.addr %s231, 21
        %s233 = smul.addr %s232, 4
        %s234 = scalar_lea.vmem %s1, %s233
        %v236 = vld [vmem:[%s229] sm:$0x7]
        %v237 = vxor.u32 %v236, 2147483648
        %v238 = vmul.f32 %v237, 1.442695
        %v239 = vpow.pop %v238
        %v240 = vadd.f32 %v239, 1.0
        %v241 = vrcp.pop %v240
        %v242 = vmul.f32 1.0, %v241
        %v243 = vld [vmem:[%s234] sm:$0xff]
        %v244 = vld [vmem:[%s234 + $0x8] sm:$0xf]
        %v245 = vld [vmem:[%s234 + $0xc] sm:$0xff]
        %v246 = vld [vmem:[%s234 + $0x14] sm:$0xf]
        %v247 = vld [vmem:[%s234 + $0x18] sm:$0xff]
        %v248 = vld [vmem:[%s234 + $0x20] sm:$0xf]
        %v249 = vld [vmem:[%s234 + $0x24] sm:$0xff]
        %v250 = vld [vmem:[%s234 + $0x2c] sm:$0xf]
        %v251 = vld [vmem:[%s234 + $0x30] sm:$0xff]
        %v252 = vld [vmem:[%s234 + $0x38] sm:$0xf]
        %v253 = vld [vmem:[%s234 + $0x3c] sm:$0xff]
        %v254 = vld [vmem:[%s234 + $0x44] sm:$0xf]
        %v255 = vld [vmem:[%s234 + $0x48] sm:$0x11]
        %v256 = vld [vmem:[%s234 + $0x50] sm:$0x1]
        %v257 = vunpack.c.l.bf16 %v243
        %v258 = vunpack.c.h.bf16 %v243
        %v259 = vunpack.c.l.bf16 %v244
        %v260 = vunpack.c.l.bf16 %v245
        %v261 = vunpack.c.h.bf16 %v245
        %v262 = vunpack.c.l.bf16 %v246
        %v263 = vunpack.c.l.bf16 %v247
        %v264 = vunpack.c.h.bf16 %v247
        %v265 = vunpack.c.l.bf16 %v248
        %v266 = vunpack.c.l.bf16 %v249
        %v267 = vunpack.c.h.bf16 %v249
        %v268 = vunpack.c.l.bf16 %v250
        %v269 = vunpack.c.l.bf16 %v251
        %v270 = vunpack.c.h.bf16 %v251
        %v271 = vunpack.c.l.bf16 %v252
        %v272 = vunpack.c.l.bf16 %v253
        %v273 = vunpack.c.h.bf16 %v253
        %v274 = vunpack.c.l.bf16 %v254
        %v275 = vunpack.c.l.bf16 %v255
        %v276 = vunpack.c.h.bf16 %v255
        %v277 = vunpack.c.l.bf16 %v256
        %v279 = vlaneseq
        %v280 = vshrl.u32 %v279, 7
        %v281 = vsub.s32 0, %v280
        %v282 = vrot.slane %v242, %v281
        %v283 = vlaneseq
        %v284 = vshrl.u32 %v283, 7
        %v285 = vsub.s32 1, %v284
        %v286 = vrot.slane %v242, %v285
        %v287 = vlaneseq
        %v288 = vshrl.u32 %v287, 7
        %v289 = vsub.s32 2, %v288
        %v290 = vrot.slane %v242, %v289
        %v294 = vmul.f32 %v257, %v282
        %v295 = vmul.f32 %v258, %v286
        %v296 = vmul.f32 %v259, %v290
        %v297 = vmul.f32 %v260, %v282
        %v298 = vmul.f32 %v261, %v286
        %v299 = vmul.f32 %v262, %v290
        %v300 = vmul.f32 %v263, %v282
        %v301 = vmul.f32 %v264, %v286
        %v302 = vmul.f32 %v265, %v290
        %v303 = vmul.f32 %v266, %v282
        %v304 = vmul.f32 %v267, %v286
        %v305 = vmul.f32 %v268, %v290
        %v306 = vmul.f32 %v269, %v282
        %v307 = vmul.f32 %v270, %v286
        %v308 = vmul.f32 %v271, %v290
        %v309 = vmul.f32 %v272, %v282
        %v310 = vmul.f32 %v273, %v286
        %v311 = vmul.f32 %v274, %v290
        %v312 = vmul.f32 %v275, %v282
        %v313 = vmul.f32 %v276, %v286
        %v314 = vmul.f32 %v277, %v290
        %v315 = vpack.c.bf16 %v297, %v294
        %v316 = vpack.c.bf16 %v298, %v295
        %v317 = vpack.c.bf16 %v299, %v296
        %v318 = vpack.c.bf16 %v303, %v300
        %v319 = vpack.c.bf16 %v304, %v301
        %v320 = vpack.c.bf16 %v305, %v302
        %v321 = vpack.c.bf16 %v309, %v306
        %v322 = vpack.c.bf16 %v310, %v307
        %v323 = vpack.c.bf16 %v311, %v308
        %v324 = vpack.c.bf16 %v312, %v312
        %v325 = vpack.c.bf16 %v313, %v313
        %v326 = vpack.c.bf16 %v314, %v314
        %v327 = vld [vmem:[%s195] sm:$0xf]
        %v328 = vld [vmem:[%s195 + $0x4] sm:$0xf]
        %v329 = vld [vmem:[%s195 + $0x8] sm:$0xf]
        %v330 = vld [vmem:[%s195 + $0xc] sm:$0xf]
        %v331 = vld [vmem:[%s195 + $0x10] sm:$0xf]
        %v332 = vld [vmem:[%s195 + $0x14] sm:$0xf]
        %v333 = vld [vmem:[%s195 + $0x18] sm:$0xf]
        %v334 = vld [vmem:[%s195 + $0x1c] sm:$0xf]
        %v335 = vld [vmem:[%s195 + $0x20] sm:$0xf]
        %v336 = vld [vmem:[%s195 + $0x24] sm:$0xf]
        %v337 = vld [vmem:[%s195 + $0x28] sm:$0xf]
        %v338 = vld [vmem:[%s195 + $0x2c] sm:$0xf]
        %v339 = vld [vmem:[%s195 + $0x30] sm:$0xf]
        %v340 = vld [vmem:[%s195 + $0x34] sm:$0xf]
        %v341 = vld [vmem:[%s195 + $0x38] sm:$0xf]
        %v342 = vld [vmem:[%s195 + $0x3c] sm:$0xf]
        %v343 = vld [vmem:[%s195 + $0x40] sm:$0xf]
        %v344 = vld [vmem:[%s195 + $0x44] sm:$0xf]
        %v345 = vld [vmem:[%s195 + $0x48] sm:$0xf]
        %v346 = vld [vmem:[%s195 + $0x4c] sm:$0xf]
        %v347 = vld [vmem:[%s195 + $0x50] sm:$0xf]
        %v348 = vld [vmem:[%s195 + $0x54] sm:$0xf]
        %v349 = vld [vmem:[%s195 + $0x58] sm:$0xf]
        %v350 = vld [vmem:[%s195 + $0x5c] sm:$0xf]
        %v351 = vld [vmem:[%s195 + $0x60] sm:$0xf]
        %v352 = vld [vmem:[%s195 + $0x64] sm:$0xf]
        %v353 = vld [vmem:[%s195 + $0x68] sm:$0xf]
        %v354 = vld [vmem:[%s195 + $0x6c] sm:$0xf]
        %v355 = vld [vmem:[%s195 + $0x70] sm:$0xf]
        %v356 = vld [vmem:[%s195 + $0x74] sm:$0xf]
        %v357 = vld [vmem:[%s195 + $0x78] sm:$0xf]
        %v358 = vld [vmem:[%s195 + $0x7c] sm:$0xf]
        %v359 = vld [vmem:[%s195 + $0x80] sm:$0xf]
        %v360 = vld [vmem:[%s195 + $0x84] sm:$0xf]
        %v361 = vld [vmem:[%s195 + $0x88] sm:$0xf]
        %v362 = vld [vmem:[%s195 + $0x8c] sm:$0xf]
        %v363 = vld [vmem:[%s195 + $0x90] sm:$0xf]
        %v364 = vld [vmem:[%s195 + $0x94] sm:$0xf]
        %v365 = vld [vmem:[%s195 + $0x98] sm:$0xf]
        %v366 = vld [vmem:[%s195 + $0x9c] sm:$0xf]
        %v367 = vld [vmem:[%s195 + $0xa0] sm:$0xf]
        %v368 = vld [vmem:[%s195 + $0xa4] sm:$0xf]
        %v369 = vld [vmem:[%s195 + $0xa8] sm:$0xf]
        %v370 = vld [vmem:[%s195 + $0xac] sm:$0xf]
        %v371 = vld [vmem:[%s195 + $0xb0] sm:$0xf]
        %v372 = vld [vmem:[%s195 + $0xb4] sm:$0xf]
        %v373 = vld [vmem:[%s195 + $0xb8] sm:$0xf]
        %v374 = vld [vmem:[%s195 + $0xbc] sm:$0xf]
        %v423 = vunpack.c.l.b16 %v327
        %v424 = vunpack.c.l.b16 %v328
        %v425 = vunpack.c.l.b16 %v329
        %v426 = vunpack.c.l.b16 %v330
        %v427 = vunpack.c.l.b16 %v331
        %v428 = vunpack.c.l.b16 %v332
        %v429 = vunpack.c.l.b16 %v333
        %v430 = vunpack.c.l.b16 %v334
        %v431 = vunpack.c.l.b16 %v335
        %v432 = vunpack.c.l.b16 %v336
        %v433 = vunpack.c.l.b16 %v337
        %v434 = vunpack.c.l.b16 %v338
        %v435 = vunpack.c.l.b16 %v339
        %v436 = vunpack.c.l.b16 %v340
        %v437 = vunpack.c.l.b16 %v341
        %v438 = vunpack.c.l.b16 %v342
        %v439 = vunpack.c.l.b16 %v343
        %v440 = vunpack.c.l.b16 %v344
        %v441 = vunpack.c.l.b16 %v345
        %v442 = vunpack.c.l.b16 %v346
        %v443 = vunpack.c.l.b16 %v347
        %v444 = vunpack.c.l.b16 %v348
        %v445 = vunpack.c.l.b16 %v349
        %v446 = vunpack.c.l.b16 %v350
        %v447 = vunpack.c.l.b16 %v351
        %v448 = vunpack.c.l.b16 %v352
        %v449 = vunpack.c.l.b16 %v353
        %v450 = vunpack.c.l.b16 %v354
        %v451 = vunpack.c.l.b16 %v355
        %v452 = vunpack.c.l.b16 %v356
        %v453 = vunpack.c.l.b16 %v357
        %v454 = vunpack.c.l.b16 %v358
        %v455 = vunpack.c.l.b16 %v359
        %v456 = vunpack.c.l.b16 %v360
        %v457 = vunpack.c.l.b16 %v361
        %v458 = vunpack.c.l.b16 %v362
        %v459 = vunpack.c.l.b16 %v363
        %v460 = vunpack.c.l.b16 %v364
        %v461 = vunpack.c.l.b16 %v365
        %v462 = vunpack.c.l.b16 %v366
        %v463 = vunpack.c.l.b16 %v367
        %v464 = vunpack.c.l.b16 %v368
        %v465 = vunpack.c.l.b16 %v369
        %v466 = vunpack.c.l.b16 %v370
        %v467 = vunpack.c.l.b16 %v371
        %v468 = vunpack.c.l.b16 %v372
        %v469 = vunpack.c.l.b16 %v373
        %v470 = vunpack.c.l.b16 %v374
        %v471 = vpack.c.b16 %v424, %v423
        %v472 = vpack.c.b16 %v426, %v425
        %v473 = vpack.c.b16 %v428, %v427
        %v474 = vpack.c.b16 %v430, %v429
        %v475 = vpack.c.b16 %v432, %v431
        %v476 = vpack.c.b16 %v434, %v433
        %v477 = vpack.c.b16 %v436, %v435
        %v478 = vpack.c.b16 %v438, %v437
        %v479 = vpack.c.b16 %v440, %v439
        %v480 = vpack.c.b16 %v442, %v441
        %v481 = vpack.c.b16 %v444, %v443
        %v482 = vpack.c.b16 %v446, %v445
        %v483 = vpack.c.b16 %v448, %v447
        %v484 = vpack.c.b16 %v450, %v449
        %v485 = vpack.c.b16 %v452, %v451
        %v486 = vpack.c.b16 %v454, %v453
        %v487 = vpack.c.b16 %v456, %v455
        %v488 = vpack.c.b16 %v458, %v457
        %v489 = vpack.c.b16 %v460, %v459
        %v490 = vpack.c.b16 %v462, %v461
        %v491 = vpack.c.b16 %v464, %v463
        %v492 = vpack.c.b16 %v466, %v465
        %v493 = vpack.c.b16 %v468, %v467
        %v494 = vpack.c.b16 %v470, %v469
        %519 = vmatprep.subr.bf16.mxu0 0
        %520 = vmatpush1.bf16.msra.mxu0 %v471
        %521 = vmatprep.subr.bf16.mxu0 0
        %522 = vmatpush1.bf16.msra.mxu0 %v472
        %523 = vmatprep.subr.bf16.mxu0 0
        %524 = vmatpush1.bf16.msra.mxu0 %v473
        %525 = vmatprep.subr.bf16.mxu0 0
        %526 = vmatpush1.bf16.msra.mxu0 %v474
        %527 = vmatprep.subr.bf16.mxu0 0
        %528 = vmatpush1.bf16.msra.mxu0 %v475
        %529 = vmatprep.subr.bf16.mxu0 0
        %530 = vmatpush1.bf16.msra.mxu0 %v476
        %531 = vmatprep.subr.bf16.mxu0 0
        %532 = vmatpush1.bf16.msra.mxu0 %v477
        %533 = vmatprep.subr.bf16.mxu0 0
        %534 = vmatpush1.bf16.msra.mxu0 %v478
        %535 = vmatprep.subr.bf16.mxu0 0
        %536 = vmatpush1.bf16.msra.mxu0 %v479
        %537 = vmatprep.subr.bf16.mxu0 0
        %538 = vmatpush1.bf16.msra.mxu0 %v480
        %539 = vmatprep.subr.bf16.mxu0 0
        %540 = vmatpush1.bf16.msra.mxu0 %v481
        %541 = vmatprep.subr.bf16.mxu0 0
        %542 = vmatpush1.bf16.msra.mxu0 %v482
        %543 = vmatprep.subr.bf16.mxu0 0
        %544 = vmatpush1.bf16.msra.mxu0 %v483
        %545 = vmatprep.subr.bf16.mxu0 0
        %546 = vmatpush1.bf16.msra.mxu0 %v484
        %547 = vmatprep.subr.bf16.mxu0 0
        %548 = vmatpush1.bf16.msra.mxu0 %v485
        %549 = vmatprep.subr.bf16.mxu0 0
        %550 = vmatpush1.bf16.msra.mxu0 %v486
        %551 = vmatprep.mubr.bf16.mxu0 %v316
        %552 = vmatmul.mubr.bf16.gmra.mrb[0].mxu0 %v315
        %v553 = vpop.f32.mrb[0].mxu0
        %v554 = vadd.f32 0.0, %v553
        %v555 = vpop.f32.mrb[0].mxu0
        %v556 = vpop.f32.mrb[0].mxu0
        %v557 = vadd.f32 0.0, %v556
        %v558 = vpop.f32.mrb[0].mxu0
        %559 = vmatprep.mubr.bf16.mxu0 %v319
        %560 = vmatmul.mubr.bf16.gmra.mrb[0].mxu0 %v318
        %v561 = vpop.f32.mrb[0].mxu0
        %v562 = vadd.f32 0.0, %v561
        %v563 = vpop.f32.mrb[0].mxu0
        %v564 = vpop.f32.mrb[0].mxu0
        %v565 = vadd.f32 0.0, %v564
        %v566 = vpop.f32.mrb[0].mxu0
        %567 = vmatprep.mubr.bf16.mxu0 %v322
        %568 = vmatmul.mubr.bf16.gmra.mrb[0].mxu0 %v321
        %v569 = vpop.f32.mrb[0].mxu0
        %v570 = vadd.f32 0.0, %v569
        %v571 = vpop.f32.mrb[0].mxu0
        %v572 = vpop.f32.mrb[0].mxu0
        %v573 = vadd.f32 0.0, %v572
        %v574 = vpop.f32.mrb[0].mxu0
        %575 = vmatprep.mubr.bf16.mxu0 %v325
        %576 = vmatmul.mubr.bf16.gmra.mrb[0].mxu0 %v324
        %v577 = vpop.f32.mrb[0].mxu0
        %v578 = vadd.f32 0.0, %v577
        %v579 = vpop.f32.mrb[0].mxu0
        %v580 = vpop.f32.mrb[0].mxu0
        %v581 = vpop.f32.mrb[0].mxu0
        %582 = vdwg.mxu0
        %583 = vmatprep.subr.bf16.mxu0 0
        %584 = vmatpush1.bf16.msra.mxu0 %v487
        %585 = vmatprep.subr.bf16.mxu0 0
        %586 = vmatpush1.bf16.msra.mxu0 %v488
        %587 = vmatprep.subr.bf16.mxu0 0
        %588 = vmatpush1.bf16.msra.mxu0 %v489
        %589 = vmatprep.subr.bf16.mxu0 0
        %590 = vmatpush1.bf16.msra.mxu0 %v490
        %591 = vmatprep.subr.bf16.mxu0 0
        %592 = vmatpush1.bf16.msra.mxu0 %v491
        %593 = vmatprep.subr.bf16.mxu0 0
        %594 = vmatpush1.bf16.msra.mxu0 %v492
        %595 = vmatprep.subr.bf16.mxu0 0
        %596 = vmatpush1.bf16.msra.mxu0 %v493
        %597 = vmatprep.subr.bf16.mxu0 0
        %598 = vmatpush1.bf16.msra.mxu0 %v494
        %599 = vmatprep.subr.bf16.mxu0 0
        %600 = vmatpush1.bf16.msra.mxu0 0
        %601 = vmatprep.subr.bf16.mxu0 0
        %602 = vmatpush1.bf16.msra.mxu0 0
        %603 = vmatprep.subr.bf16.mxu0 0
        %604 = vmatpush1.bf16.msra.mxu0 0
        %605 = vmatprep.subr.bf16.mxu0 0
        %606 = vmatpush1.bf16.msra.mxu0 0
        %607 = vmatprep.subr.bf16.mxu0 0
        %608 = vmatpush1.bf16.msra.mxu0 0
        %609 = vmatprep.subr.bf16.mxu0 0
        %610 = vmatpush1.bf16.msra.mxu0 0
        %611 = vmatprep.subr.bf16.mxu0 0
        %612 = vmatpush1.bf16.msra.mxu0 0
        %613 = vmatprep.subr.bf16.mxu0 0
        %614 = vmatpush1.bf16.msra.mxu0 0
        %615 = vmatprep.mubr.bf16.mxu0 0
        %616 = vmatmul.mubr.bf16.gmra.mrb[0].mxu0 %v317
        %v617 = vpop.f32.mrb[0].mxu0
        %v618 = vadd.f32 %v554, %v617
        %v619 = vpop.f32.mrb[0].mxu0
        %v620 = vpop.f32.mrb[0].mxu0
        %v621 = vadd.f32 %v557, %v620
        %v622 = vpop.f32.mrb[0].mxu0
        %623 = vmatprep.mubr.bf16.mxu0 0
        %624 = vmatmul.mubr.bf16.gmra.mrb[0].mxu0 %v320
        %v625 = vpop.f32.mrb[0].mxu0
        %v626 = vadd.f32 %v562, %v625
        %v627 = vpop.f32.mrb[0].mxu0
        %v628 = vpop.f32.mrb[0].mxu0
        %v629 = vadd.f32 %v565, %v628
        %v630 = vpop.f32.mrb[0].mxu0
        %631 = vmatprep.mubr.bf16.mxu0 0
        %632 = vmatmul.mubr.bf16.gmra.mrb[0].mxu0 %v323
        %v633 = vpop.f32.mrb[0].mxu0
        %v634 = vadd.f32 %v570, %v633
        %v635 = vpop.f32.mrb[0].mxu0
        %v636 = vpop.f32.mrb[0].mxu0
        %v637 = vadd.f32 %v573, %v636
        %v638 = vpop.f32.mrb[0].mxu0
        %639 = vmatprep.mubr.bf16.mxu0 0
        %640 = vmatmul.mubr.bf16.gmra.mrb[0].mxu0 %v326
        %v641 = vpop.f32.mrb[0].mxu0
        %v642 = vadd.f32 %v578, %v641
        %v643 = vpop.f32.mrb[0].mxu0
        %v644 = vpop.f32.mrb[0].mxu0
        %v645 = vpop.f32.mrb[0].mxu0
        %646 = vdwg.mxu0
        %v647 = vpack.c.bf16 %v621, %v618
        %v648 = vpack.c.bf16 %v629, %v626
        %v649 = vpack.c.bf16 %v637, %v634
        %v650 = vpack.c.bf16 %v642, %v642
        %v655 = vunpack.c.l.b16 %v647
        %v656 = vunpack.c.h.b16 %v647
        %v657 = vunpack.c.l.b16 %v648
        %v658 = vunpack.c.h.b16 %v648
        %v659 = vunpack.c.l.b16 %v649
        %v660 = vunpack.c.h.b16 %v649
        %v661 = vunpack.c.l.b16 %v650
        %v662 = vpack.c.b16 %v655, %v655
        %v663 = vpack.c.b16 %v656, %v656
        %v664 = vpack.c.b16 %v657, %v657
        %v665 = vpack.c.b16 %v658, %v658
        %v666 = vpack.c.b16 %v659, %v659
        %v667 = vpack.c.b16 %v660, %v660
        %v668 = vpack.c.b16 %v661, %v661
        %676 = vst [vmem:[%s225] sm:$0xf] %v662
        %677 = vst [vmem:[%s225 + $0x4] sm:$0xf] %v663
        %678 = vst [vmem:[%s225 + $0x8] sm:$0xf] %v664
        %679 = vst [vmem:[%s225 + $0xc] sm:$0xf] %v665
        %680 = vst [vmem:[%s225 + $0x10] sm:$0xf] %v666
        %681 = vst [vmem:[%s225 + $0x14] sm:$0xf] %v667
        %vm682 = vcmask 1040384
        %vm683 = vsmask.f32 256
        %vm684 = vmand %vm682, %vm683
        %v685 = vld [vmem:[%s225 + $0x18] sm:$0x1]
        %v686 = vsel %vm684, %v668, %v685
        %687 = vst [vmem:[%s225 + $0x18] sm:$0x1] %v686
        %s688 = sand.u32 %s117, 1
        %s689 = sand.u32 %s117, 1
        %s690 = smul.addr %s689, 28
        %s691 = scalar_lea.vmem [#allocation4], %s690
        // Predicated region
        $region37: #{tpu_custom_call.1} parent=31 // pred_check
          %p692 = pneg %p127
        $region38: #{tpu_custom_call.1} parent=31 // pred_check_branch
          %694 = sbr.rel (%p692) target = $region40
        $region39: #{tpu_custom_call.1} parent=31 // pred_region
          %s695 = smul.addr %s22, 14
          %s696 = sadd.s32 %s21, %s695
          %s697 = smul.addr %s696, 4
          %s698 = scalar_lea.vmem %s3, %s697
          // Predicated region
          $region41: #{tpu_custom_call.1} parent=39 // pred_check
            _
          $region42: #{tpu_custom_call.1} parent=39 // pred_check_branch
            %700 = sbr.rel (0) target = $region44
          $region43: #{tpu_custom_call.1} parent=39 // pred_region
            // Predicated region
            $region45: #{tpu_custom_call.1} parent=43 // pred_check
              _
            $region46: #{tpu_custom_call.1} parent=43 // pred_check_branch
              %702 = sbr.rel target = $region48
            $region47: #{tpu_custom_call.1} parent=43 // pred_region
              // Predicated region
              $region60: #{tpu_custom_call.1} parent=47 // pred_check
                _
              $region61: #{tpu_custom_call.1} parent=47 // pred_check_branch
                %729 = sbr.rel (0) target = $region63
              $region62: #{tpu_custom_call.1} parent=47 // pred_region
                loop: start=0, step=1, limit=1
                $region64: #{tpu_custom_call.1} parent=62 // loop_pre_header
                  _
                $region65: #{tpu_custom_call.1} parent=62 // loop_header
                  %s731 = sphi 0, %s735
                  %p732 = scmp.ge.s32.totalorder %s731, 1
                  %s736 = sphi %s691, %s691
                  %s737 = sphi %s698, %s698
                $region66: #{tpu_custom_call.1} parent=62 // loop_header_branch
                  %734 = sbr.rel (%p732) target = $region70
                $region67: #{tpu_custom_call.1} parent=62 // loop_body
                  _
                $region68: #{tpu_custom_call.1} parent=62 // loop_footer
                  %s735 = sadd.s32 1, %s731
                $region69: #{tpu_custom_call.1} parent=62 // loop_footer_branch
                  %730 = sbr.rel target = $region65
                $region70: #{tpu_custom_call.1} parent=62 // loop_exit
                  _
                loop: start=0, step=1, limit=1
                $region71: #{tpu_custom_call.1} parent=62 // loop_pre_header
                  _
                $region72: #{tpu_custom_call.1} parent=62 // loop_header
                  %s740 = sphi 0, %s744
                  %p741 = scmp.ge.s32.totalorder %s740, 1
                  %s745 = sphi %s691, %s691
                  %s746 = sphi %s698, %s698
                $region73: #{tpu_custom_call.1} parent=62 // loop_header_branch
                  %743 = sbr.rel (%p741) target = $region77
                $region74: #{tpu_custom_call.1} parent=62 // loop_body
                  %v747 = vld [vmem:[%s745] sm:$0xf]
                  %748 = vst [vmem:[%s746] sm:$0xf] %v747
                  %v749 = vld [vmem:[%s745 + $0x4] sm:$0xf]
                  %750 = vst [vmem:[%s746 + $0x8] sm:$0xf] %v749
                  %v751 = vld [vmem:[%s745 + $0x8] sm:$0xf]
                  %752 = vst [vmem:[%s746 + $0x10] sm:$0xf] %v751
                  %v753 = vld [vmem:[%s745 + $0xc] sm:$0xf]
                  %754 = vst [vmem:[%s746 + $0x18] sm:$0xf] %v753
                  %v755 = vld [vmem:[%s745 + $0x10] sm:$0xf]
                  %756 = vst [vmem:[%s746 + $0x20] sm:$0xf] %v755
                  %v757 = vld [vmem:[%s745 + $0x14] sm:$0xf]
                  %758 = vst [vmem:[%s746 + $0x28] sm:$0xf] %v757
                  %v759 = vld [vmem:[%s745 + $0x18] sm:$0xf]
                  %760 = vst [vmem:[%s746 + $0x30] sm:$0xf] %v759
                $region75: #{tpu_custom_call.1} parent=62 // loop_footer
                  %s744 = sadd.s32 1, %s740
                $region76: #{tpu_custom_call.1} parent=62 // loop_footer_branch
                  %739 = sbr.rel target = $region72
                $region77: #{tpu_custom_call.1} parent=62 // loop_exit
                  _
              $region63: #{tpu_custom_call.1} parent=47 // pred_fallthru
                _
            $region48: #{tpu_custom_call.1} parent=43 // pred_fallthru
              _
            // Predicated region
            $region49: #{tpu_custom_call.1} parent=43 // pred_check
              _
            $region50: #{tpu_custom_call.1} parent=43 // pred_check_branch
              %704 = sbr.rel (0) target = $region52
            $region51: #{tpu_custom_call.1} parent=43 // pred_region
              loop: start=0, step=1, limit=1
              $region53: #{tpu_custom_call.1} parent=51 // loop_pre_header
                _
              $region54: #{tpu_custom_call.1} parent=51 // loop_header
                %s707 = sphi 0, %s711
                %p708 = scmp.ge.s32.totalorder %s707, 1
                %s712 = sphi %s691, %s691
                %s713 = sphi %s698, %s698
              $region55: #{tpu_custom_call.1} parent=51 // loop_header_branch
                %710 = sbr.rel (%p708) target = $region59
              $region56: #{tpu_custom_call.1} parent=51 // loop_body
                %v714 = vld [vmem:[%s712] sm:$0xf]
                %715 = vst [vmem:[%s713] sm:$0xf] %v714
                %v716 = vld [vmem:[%s712 + $0x4] sm:$0xf]
                %717 = vst [vmem:[%s713 + $0x8] sm:$0xf] %v716
                %v718 = vld [vmem:[%s712 + $0x8] sm:$0xf]
                %719 = vst [vmem:[%s713 + $0x10] sm:$0xf] %v718
                %v720 = vld [vmem:[%s712 + $0xc] sm:$0xf]
                %721 = vst [vmem:[%s713 + $0x18] sm:$0xf] %v720
                %v722 = vld [vmem:[%s712 + $0x10] sm:$0xf]
                %723 = vst [vmem:[%s713 + $0x20] sm:$0xf] %v722
                %v724 = vld [vmem:[%s712 + $0x14] sm:$0xf]
                %725 = vst [vmem:[%s713 + $0x28] sm:$0xf] %v724
                %v726 = vld [vmem:[%s712 + $0x18] sm:$0xf]
                %727 = vst [vmem:[%s713 + $0x30] sm:$0xf] %v726
              $region57: #{tpu_custom_call.1} parent=51 // loop_footer
                %s711 = sadd.s32 1, %s707
              $region58: #{tpu_custom_call.1} parent=51 // loop_footer_branch
                %706 = sbr.rel target = $region54
              $region59: #{tpu_custom_call.1} parent=51 // loop_exit
                _
            $region52: #{tpu_custom_call.1} parent=43 // pred_fallthru
              _
          $region44: #{tpu_custom_call.1} parent=39 // pred_fallthru
            _
          %761 = vnop
        $region40: #{tpu_custom_call.1} parent=31 // pred_fallthru
          _
      $region32: #{tpu_custom_call.1} parent=5 // pred_fallthru
        _
      %p762 = scmp.le.s32.totalorder 2, %s12
      // Predicated region
      $region78: #{tpu_custom_call.1} parent=5 // pred_check
        %p763 = pneg %p762
      $region79: #{tpu_custom_call.1} parent=5 // pred_check_branch
        %765 = sbr.rel (%p763) target = $region81
      $region80: #{tpu_custom_call.1} parent=5 // pred_region
        %s766 = ssub.s32 %s12, 2
        // Predicated region
        $region82: #{tpu_custom_call.1} parent=80 // pred_check
          %p767 = pneg %p133
        $region83: #{tpu_custom_call.1} parent=80 // pred_check_branch
          %769 = sbr.rel (%p767) target = $region85
        $region84: #{tpu_custom_call.1} parent=80 // pred_region
          %s770 = sand.u32 %s118, 1
          %s771 = sand.u32 %s118, 1
          %s772 = smul.addr %s771, 28
          %s773 = scalar_lea.vmem [#allocation4], %s772
        $region85: #{tpu_custom_call.1} parent=80 // pred_fallthru
          _
      $region81: #{tpu_custom_call.1} parent=5 // pred_fallthru
        _
    $region6: #{tpu_custom_call.1} parent=1 // loop_footer
      %s16 = sadd.s32 1, %s12
    $region7: #{tpu_custom_call.1} parent=1 // loop_footer_branch
      %11 = sbr.rel target = $region3
    $region8: #{tpu_custom_call.1} parent=1 // loop_exit
      _
    %774 = vsyncpa [#allocation3], 1
    %s775 = scalar_lea.sflag [#allocation3], 1
    %776 = vsyncpa %s775, 1

</llo_original>
